<compile_context>
chip_gen: v5e
topology: v5e:2x2
jax: 0.10.0
libtpu: 0.0.40
codegen_flags: <defaults>
</compile_context>

<pallas_src>
from functools import partial

import jax
import jax.numpy as jnp
import numpy as np
from jax.experimental import pallas as pl
from jax.experimental.pallas import tpu as pltpu

_LANE = 128
_DEFAULT_TILE = 256            # (8,128)-aligned; double-buffered bf16 tiles ~1 MiB
_COMPUTE_DTYPE = jnp.bfloat16  # MXU streams bf16; accumulation stays f32


# ---------------------------------------------------------------------------
# Shape / padding helpers (padding is done once, outside the hop loop).
# ---------------------------------------------------------------------------
def _round_up(v, m):
    return -(-v // m) * m


def _pad_dim(d, tile=_DEFAULT_TILE):
    """Padded extent: lane-dense (>=128) and evenly tileable by `tile`."""
    return _round_up(d, _LANE) if d <= tile else _round_up(d, tile)


def _tile_for(dp, tile=_DEFAULT_TILE):
    return dp if dp <= tile else tile


def _pad2d_to(a, rows, cols):
    r, c = a.shape
    if (r, c) == (rows, cols):
        return a
    return jnp.pad(a, ((0, rows - r), (0, cols - c)))


# ---------------------------------------------------------------------------
# Fused layer kernels:  out[i,j] = relu?( sum_k adj[i,k] @ (x[k,:] @ W[:,j]) )
# ---------------------------------------------------------------------------
def _fused_layer_kernel(adj_ref, x_ref, w_ref, o_ref, acc_ref, *, apply_relu):
    """K-reduction variant: f32 VMEM accumulator over grid axis 2."""
    @pl.when(pl.program_id(2) == 0)
    def _init():
        acc_ref[...] = jnp.zeros_like(acc_ref)

    # Recompute the support tile on the MXU (cheap: F_in / tm extra FLOPs)
    # instead of round-tripping it through HBM.
    support = jnp.dot(x_ref[...], w_ref[...],
                      preferred_element_type=jnp.float32)
    acc_ref[...] += jnp.dot(adj_ref[...], support.astype(adj_ref.dtype),
                            preferred_element_type=jnp.float32)

    @pl.when(pl.program_id(2) == pl.num_programs(2) - 1)
    def _finalize():
        acc = acc_ref[...]
        if apply_relu:
            acc = jnp.maximum(acc, 0.0)
        o_ref[...] = acc.astype(o_ref.dtype)


def _fused_layer_kernel_1k(adj_ref, x_ref, w_ref, o_ref, *, apply_relu):
    """Single-k variant: no accumulator scratch / zero-init / read-modify-write."""
    support = jnp.dot(x_ref[...], w_ref[...],
                      preferred_element_type=jnp.float32)
    out = jnp.dot(adj_ref[...], support.astype(adj_ref.dtype),
                  preferred_element_type=jnp.float32)
    if apply_relu:
        out = jnp.maximum(out, 0.0)
    o_ref[...] = out.astype(o_ref.dtype)


def fused_gcn_layer(adj_p, x_p, w_p, *, apply_relu, tile=_DEFAULT_TILE):
    """One GCN hop on already-padded (lane-dense) operands."""
    npad = adj_p.shape[0]
    fin = x_p.shape[1]
    fout = w_p.shape[1]
    assert adj_p.shape == (npad, npad) and x_p.shape == (npad, fin)
    assert w_p.shape == (fin, fout)

    tm = _tile_for(npad, tile)
    tk = _tile_for(npad, tile)
    tn = _tile_for(fout, tile)
    # v7x has two TensorCores sharded over "parallel" grid axes: make the row
    # axis split into >= 2 blocks whenever the padded node count allows it.
    if npad // tm < 2 and tm % 2 == 0 and tm // 2 >= 16:
        tm //= 2

    grid = (npad // tm, fout // tn, npad // tk)
    single_k = grid[2] == 1

    itemsize = np.dtype(adj_p.dtype).itemsize
    cost = pl.CostEstimate(
        flops=2 * npad * npad * fout + 2 * grid[0] * npad * fin * fout,
        transcendentals=0,
        bytes_accessed=itemsize * (grid[1] * npad * npad            # adj tiles
                                   + grid[0] * grid[1] * npad * fin  # x tiles
                                   + grid[0] * fin * fout            # W tiles
                                   + npad * fout),                   # output
    )

    in_specs = [
        pl.BlockSpec((tm, tk), lambda i, j, k: (i, k)),   # adj row/col tile
        pl.BlockSpec((tk, fin), lambda i, j, k: (k, 0)),  # x rows of this k-tile
        pl.BlockSpec((fin, tn), lambda i, j, k: (0, j)),  # W col tile (VMEM-resident over k)
    ]
    out_specs = pl.BlockSpec((tm, tn), lambda i, j, k: (i, j))

    if single_k:
        kernel = partial(_fused_layer_kernel_1k, apply_relu=apply_relu)
        scratch = []
    else:
        kernel = partial(_fused_layer_kernel, apply_relu=apply_relu)
        scratch = [pltpu.VMEM((tm, tn), jnp.float32)]

    return pl.pallas_call(
        kernel,
        out_shape=jax.ShapeDtypeStruct((npad, fout), adj_p.dtype),
        grid_spec=pltpu.PrefetchScalarGridSpec(
            num_scalar_prefetch=0,
            grid=grid,
            in_specs=in_specs,
            out_specs=out_specs,
            scratch_shapes=scratch,
        ),
        compiler_params=pltpu.CompilerParams(
            dimension_semantics=("parallel", "parallel", "arbitrary"),
            vmem_limit_bytes=32 * 1024 * 1024,  # ample headroom on v5e/v6e/v7x
        ),
        cost_estimate=cost,
    )(adj_p, x_p, w_p)


# ---------------------------------------------------------------------------
# GCN forward (eval mode): hops of adj @ (x @ W_i) with ReLU between hops.
# ---------------------------------------------------------------------------
def gcn_forward(x, adj, weights):
    n, f_in = x.shape
    n_layers = len(weights)
    dims = [f_in] + [int(w.shape[1]) for w in weights]

    # Pad ONCE (lane-dense, tileable) and keep padded shapes across all hops;
    # zero padding contributes nothing to the matmuls and ReLU(0) == 0.
    npad = _pad_dim(n)
    dims_p = [_pad_dim(d) for d in dims]

    adj_p = _pad2d_to(adj, npad, npad).astype(_COMPUTE_DTYPE)
    x_p = _pad2d_to(x, npad, dims_p[0]).astype(_COMPUTE_DTYPE)
    ws_p = [
        _pad2d_to(w, dims_p[i], dims_p[i + 1]).astype(_COMPUTE_DTYPE)
        for i, w in enumerate(weights)
    ]

    for i, w_p in enumerate(ws_p):
        x_p = fused_gcn_layer(adj_p, x_p, w_p, apply_relu=(i < n_layers - 1))
        # TODO(synk): F.dropout(p, training) is the identity at inference;
        # training-mode / MC-dropout sampling is not implemented in-kernel.

    # Single un-pad slice at the very end; return f32 like the torch module.
    return x_p[:n, : dims[-1]].astype(jnp.float32)


def gcn_ref(x, adj, weights):
    """float64 numpy reference mirroring the PyTorch forward (eval mode)."""
    x = np.asarray(x, np.float64)
    adj = np.asarray(adj, np.float64)
    for i, w in enumerate(weights):
        w = np.asarray(w, np.float64)
        x = adj @ (x @ w)
        if i < len(weights) - 1:
            x = np.maximum(x, 0.0)
    return x


if __name__ == "__main__":
    # Small synthetic GCN: 16 nodes, in_feats=32, n_hidden=32, graph_hops=3.
    num_nodes, in_feats, n_hidden, graph_hops = 16, 32, 32, 3

    key = jax.random.PRNGKey(0)
    k_x, k_adj, *k_w = jax.random.split(key, 2 + graph_hops)

    x = jax.random.normal(k_x, (num_nodes, in_feats), jnp.float32)
    adj_raw = jax.random.uniform(k_adj, (num_nodes, num_nodes), jnp.float32)
    adj = adj_raw / jnp.sum(adj_raw, axis=1, keepdims=True)  # row-stochastic adjacency

    def xavier_uniform(k, shape):
        bound = float(np.sqrt(6.0 / (shape[0] + shape[1])))
        return jax.random.uniform(k, shape, jnp.float32, -bound, bound)

    dims = [in_feats] + [n_hidden] * graph_hops
    weights = [xavier_uniform(k_w[i], (dims[i], dims[i + 1]))
               for i in range(graph_hops)]

    fwd = jax.jit(gcn_forward)
    out = jax.block_until_ready(fwd(x, adj, weights))

    ref = gcn_ref(x, adj, weights)
    # bf16 operand streaming with f32 accumulation => slightly loose tolerance.
    np.testing.assert_allclose(np.asarray(out, np.float64), ref,
                               rtol=5e-2, atol=5e-2)
    print("KERNEL_OK")
</pallas_src>

<mosaic_0001>
module attributes {stable_mosaic.version = 11 : i64} {
  func.func @_fused_layer_kernel_1k(%arg0: i32, %arg1: i32, %arg2: i32, %arg3: memref<64x128xbf16, #tpu.memory_space<vmem>>, %arg4: memref<128x128xbf16, #tpu.memory_space<vmem>>, %arg5: memref<128x128xbf16, #tpu.memory_space<vmem>>, %arg6: memref<64x128xbf16, #tpu.memory_space<vmem>>) attributes {dimension_semantics = [#tpu.dimension_semantics<parallel>, #tpu.dimension_semantics<parallel>, #tpu.dimension_semantics<arbitrary>], iteration_bounds = array<i64: 2, 1, 1>, scalar_prefetch = 0 : i64, scratch_operands = 0 : i64, tpu.core_type = #tpu.core_type<tc>, window_params = [{transform_indices = @transform_0, window_bounds = array<i64: 64, 128>}, {transform_indices = @transform_1, window_bounds = array<i64: 128, 128>}, {transform_indices = @transform_2, window_bounds = array<i64: 128, 128>}, {transform_indices = @transform_3, window_bounds = array<i64: 64, 128>}]} {
    %c0 = arith.constant 0 : index
    %c0_0 = arith.constant 0 : index
    %0 = vector.load %arg4[%c0, %c0_0] : memref<128x128xbf16, #tpu.memory_space<vmem>>, vector<128x128xbf16>
    %c0_1 = arith.constant 0 : index
    %c0_2 = arith.constant 0 : index
    %1 = vector.load %arg5[%c0_1, %c0_2] : memref<128x128xbf16, #tpu.memory_space<vmem>>, vector<128x128xbf16>
    %cst = arith.constant dense<0.000000e+00> : vector<128x128xf32>
    %2 = tpu.matmul %0, %1, %cst {dimension_numbers = #tpu.dot_dimension_numbers<[1], [0], [0], [1], [0, 0, 1, 1], [], []>} : vector<128x128xbf16>, vector<128x128xbf16>, vector<128x128xf32> -> vector<128x128xf32>
    %c0_3 = arith.constant 0 : index
    %c0_4 = arith.constant 0 : index
    %3 = vector.load %arg3[%c0_3, %c0_4] : memref<64x128xbf16, #tpu.memory_space<vmem>>, vector<64x128xbf16>
    %4 = arith.truncf %2 : vector<128x128xf32> to vector<128x128xbf16>
    %cst_5 = arith.constant dense<0.000000e+00> : vector<64x128xf32>
    %5 = tpu.matmul %3, %4, %cst_5 {dimension_numbers = #tpu.dot_dimension_numbers<[1], [0], [0], [1], [0, 0, 1, 1], [], []>} : vector<64x128xbf16>, vector<128x128xbf16>, vector<64x128xf32> -> vector<64x128xf32>
    %cst_6 = arith.constant 0.000000e+00 : f32
    %6 = vector.broadcast %cst_6 : f32 to vector<64x128xf32>
    %7 = arith.maximumf %5, %6 : vector<64x128xf32>
    %8 = arith.truncf %7 : vector<64x128xf32> to vector<64x128xbf16>
    %c0_7 = arith.constant 0 : index
    %c0_8 = arith.constant 0 : index
    %9 = vector.load %arg6[%c0_7, %c0_8] : memref<64x128xbf16, #tpu.memory_space<vmem>>, vector<64x128xbf16>
    tpu.vector_store %arg6[%c0_7, %c0_8], %8 {strides = array<i32>} : memref<64x128xbf16, #tpu.memory_space<vmem>>, vector<64x128xbf16>,
    return
  }
  func.func @transform_0(%arg0: i32, %arg1: i32, %arg2: i32) -> (i32, i32) {
    %c0_i32 = arith.constant 0 : i32
    return %arg0, %arg2 : i32, i32
  }
  func.func @transform_1(%arg0: i32, %arg1: i32, %arg2: i32) -> (i32, i32) {
    %c0_i32 = arith.constant 0 : i32
    %c0_i32_0 = arith.constant 0 : i32
    return %arg2, %c0_i32 : i32, i32
  }
  func.func @transform_2(%arg0: i32, %arg1: i32, %arg2: i32) -> (i32, i32) {
    %c0_i32 = arith.constant 0 : i32
    %c0_i32_0 = arith.constant 0 : i32
    return %c0_i32, %arg1 : i32, i32
  }
  func.func @transform_3(%arg0: i32, %arg1: i32, %arg2: i32) -> (i32, i32) {
    %c0_i32 = arith.constant 0 : i32
    return %arg0, %arg1 : i32, i32
  }
}

module attributes {stable_mosaic.version = 11 : i64} {
  func.func @_fused_layer_kernel_1k(%arg0: i32, %arg1: i32, %arg2: i32, %arg3: memref<64x128xbf16, #tpu.memory_space<vmem>>, %arg4: memref<128x128xbf16, #tpu.memory_space<vmem>>, %arg5: memref<128x128xbf16, #tpu.memory_space<vmem>>, %arg6: memref<64x128xbf16, #tpu.memory_space<vmem>>) attributes {dimension_semantics = [#tpu.dimension_semantics<parallel>, #tpu.dimension_semantics<parallel>, #tpu.dimension_semantics<arbitrary>], iteration_bounds = array<i64: 2, 1, 1>, scalar_prefetch = 0 : i64, scratch_operands = 0 : i64, tpu.core_type = #tpu.core_type<tc>, window_params = [{transform_indices = @transform_0, window_bounds = array<i64: 64, 128>}, {transform_indices = @transform_1, window_bounds = array<i64: 128, 128>}, {transform_indices = @transform_2, window_bounds = array<i64: 128, 128>}, {transform_indices = @transform_3, window_bounds = array<i64: 64, 128>}]} {
    %c0 = arith.constant 0 : index
    %c0_0 = arith.constant 0 : index
    %0 = vector.load %arg4[%c0, %c0_0] : memref<128x128xbf16, #tpu.memory_space<vmem>>, vector<128x128xbf16>
    %c0_1 = arith.constant 0 : index
    %c0_2 = arith.constant 0 : index
    %1 = vector.load %arg5[%c0_1, %c0_2] : memref<128x128xbf16, #tpu.memory_space<vmem>>, vector<128x128xbf16>
    %cst = arith.constant dense<0.000000e+00> : vector<128x128xf32>
    %2 = tpu.matmul %0, %1, %cst {dimension_numbers = #tpu.dot_dimension_numbers<[1], [0], [0], [1], [0, 0, 1, 1], [], []>} : vector<128x128xbf16>, vector<128x128xbf16>, vector<128x128xf32> -> vector<128x128xf32>
    %c0_3 = arith.constant 0 : index
    %c0_4 = arith.constant 0 : index
    %3 = vector.load %arg3[%c0_3, %c0_4] : memref<64x128xbf16, #tpu.memory_space<vmem>>, vector<64x128xbf16>
    %4 = arith.truncf %2 : vector<128x128xf32> to vector<128x128xbf16>
    %cst_5 = arith.constant dense<0.000000e+00> : vector<64x128xf32>
    %5 = tpu.matmul %3, %4, %cst_5 {dimension_numbers = #tpu.dot_dimension_numbers<[1], [0], [0], [1], [0, 0, 1, 1], [], []>} : vector<64x128xbf16>, vector<128x128xbf16>, vector<64x128xf32> -> vector<64x128xf32>
    %6 = arith.truncf %5 : vector<64x128xf32> to vector<64x128xbf16>
    %c0_6 = arith.constant 0 : index
    %c0_7 = arith.constant 0 : index
    %7 = vector.load %arg6[%c0_6, %c0_7] : memref<64x128xbf16, #tpu.memory_space<vmem>>, vector<64x128xbf16>
    tpu.vector_store %arg6[%c0_6, %c0_7], %6 {strides = array<i32>} : memref<64x128xbf16, #tpu.memory_space<vmem>>, vector<64x128xbf16>,
    return
  }
  func.func @transform_0(%arg0: i32, %arg1: i32, %arg2: i32) -> (i32, i32) {
    %c0_i32 = arith.constant 0 : i32
    return %arg0, %arg2 : i32, i32
  }
  func.func @transform_1(%arg0: i32, %arg1: i32, %arg2: i32) -> (i32, i32) {
    %c0_i32 = arith.constant 0 : i32
    %c0_i32_0 = arith.constant 0 : i32
    return %arg2, %c0_i32 : i32, i32
  }
  func.func @transform_2(%arg0: i32, %arg1: i32, %arg2: i32) -> (i32, i32) {
    %c0_i32 = arith.constant 0 : i32
    %c0_i32_0 = arith.constant 0 : i32
    return %c0_i32, %arg1 : i32, i32
  }
  func.func @transform_3(%arg0: i32, %arg1: i32, %arg2: i32) -> (i32, i32) {
    %c0_i32 = arith.constant 0 : i32
    return %arg0, %arg1 : i32, i32
  }
}

</mosaic_0001>

<llo_original>
// kernel: gcn_forward.3
$region0: #{gcn_forward.3}
  #allocation0 [shape = 'u32[]', space=smem, size = 0x4, offset = 0x4, fixed_abs, tag = 'smem constant byte address 0x4 - core index']
  #allocation1 [shape = 'u32[72,128]{1,0:T(1,128)}', space=vmem, size = 0x9000, scoped, tag = 'internal scratch']
  %s0 = inlined_call_operand.vmem [shape: bf16[128,128], index: 0, kind: input, shape index: {}]
  %s1 = inlined_call_operand.vmem [shape: bf16[128,128], index: 1, kind: input, shape index: {}]
  %s2 = inlined_call_operand.vmem [shape: bf16[128,128], index: 2, kind: input, shape index: {}]
  %s3 = inlined_call_operand.vmem [shape: bf16[128,128], index: 3, kind: output, shape index: {}]
  %s4 = sld [smem:[#allocation0]]
  $region45: #{gcn_forward.3} parent=0
    _
  %s6 = ssub.s32 1, %s4
  %s7 = scalar_select 0, %s6, %s4
  loop: start=0, step=1, limit=4
  $region2: #{gcn_forward.3} parent=0 // loop_pre_header
    _
  $region3: #{gcn_forward.3} parent=0 // loop_header
    %s9 = sphi 0, %s13
    %p10 = scmp.ge.s32.totalorder %s9, 4
    %s16 = sphi 0, %s35
    %s17 = sphi 0, %s31
    %s18 = sphi 0, %s27
    %s19 = sphi 0, %s16
    %s20 = sphi 0, %s17
    %s21 = sphi 0, %s18
    %s22 = sphi 0, %s19
    %s23 = sphi 0, %s20
    %s24 = sphi 0, %s21
    %s40 = sphi 0, %s42
    %s43 = sphi 0, %s40
    %s44 = sphi 0, %s43
    %s60 = sphi 0, %s44
    %s66 = sphi 0, %s68
    %s69 = sphi 0, %s66
    %s70 = sphi 0, %s69
    %s86 = sphi 0, %s70
    %s92 = sphi 0, %s94
    %s95 = sphi 0, %s92
    %s96 = sphi 0, %s95
    %s112 = sphi 0, %s96
    %s120 = sphi 0, %s122
    %s123 = sphi 0, %s120
    %s124 = sphi 0, %s123
    %s140 = sphi 0, %s124
  $region4: #{gcn_forward.3} parent=0 // loop_header_branch
    %12 = sbr.rel (%p10) target = $region8
  $region5: #{gcn_forward.3} parent=0 // loop_body
    %s14 = ssub.s32 %s9, 1
    %s15 = ssub.s32 %s9, 2
    %s25 = sadd.s32 1, %s18
    %p26 = scmp.ge.s32.totalorder %s25, 1
    %s27 = scalar_select %p26, 0, %s25
    %s28 = sadd.s32 1, %s17
    %s29 = scalar_select %p26, %s28, %s17
    %p30 = scmp.ge.s32.totalorder %s29, 1
    %s31 = scalar_select %p30, 0, %s29
    %s32 = sadd.s32 1, %s16
    %s33 = scalar_select %p30, %s32, %s16
    %p34 = scmp.ge.s32.totalorder %s33, 2
    %s35 = scalar_select %p34, 0, %s33
    %s36 = ssub.s32 %s16, %s35
    %s37 = ssub.s32 %s18, %s27
    %s38 = sor.u32 %s36, %s37
    %p39 = scmp.eq.s32.totalorder %s38, 0
    %s41 = sadd.s32 %s40, 1
    %s42 = scalar_select %p39, %s40, %s41
    %p45 = pneg %p39
    %p46 = scmp.eq.s32.totalorder %s9, 1
    %p47 = por %p45, %p46
    %p48 = scmp.ne.s32.totalorder %s40, %s43
    %p49 = scmp.eq.s32.totalorder %s9, 0
    %p50 = por %p48, %p49
    %p51 = scmp.ne.s32.totalorder %s40, %s43
    %p52 = scmp.eq.s32.totalorder %s14, 1
    %p53 = por %p51, %p52
    %p54 = scmp.ne.s32.totalorder %s43, %s44
    %p55 = scmp.eq.s32.totalorder %s14, 0
    %p56 = por %p54, %p55
    %p57 = scmp.ne.s32.totalorder %s43, %s44
    %p58 = scmp.eq.s32.totalorder %s15, 1
    %p59 = por %p57, %p58
    %p61 = scmp.ne.s32.totalorder %s44, %s60
    %p62 = scmp.eq.s32.totalorder %s15, 0
    %p63 = por %p61, %p62
    %s64 = ssub.s32 %s18, %s27
    %p65 = scmp.eq.s32.totalorder %s64, 0
    %s67 = sadd.s32 %s66, 1
    %s68 = scalar_select %p65, %s66, %s67
    %p71 = pneg %p65
    %p72 = scmp.eq.s32.totalorder %s9, 1
    %p73 = por %p71, %p72
    %p74 = scmp.ne.s32.totalorder %s66, %s69
    %p75 = scmp.eq.s32.totalorder %s9, 0
    %p76 = por %p74, %p75
    %p77 = scmp.ne.s32.totalorder %s66, %s69
    %p78 = scmp.eq.s32.totalorder %s14, 1
    %p79 = por %p77, %p78
    %p80 = scmp.ne.s32.totalorder %s69, %s70
    %p81 = scmp.eq.s32.totalorder %s14, 0
    %p82 = por %p80, %p81
    %p83 = scmp.ne.s32.totalorder %s69, %s70
    %p84 = scmp.eq.s32.totalorder %s15, 1
    %p85 = por %p83, %p84
    %p87 = scmp.ne.s32.totalorder %s70, %s86
    %p88 = scmp.eq.s32.totalorder %s15, 0
    %p89 = por %p87, %p88
    %s90 = ssub.s32 %s17, %s31
    %p91 = scmp.eq.s32.totalorder %s90, 0
    %s93 = sadd.s32 %s92, 1
    %s94 = scalar_select %p91, %s92, %s93
    %p97 = pneg %p91
    %p98 = scmp.eq.s32.totalorder %s9, 1
    %p99 = por %p97, %p98
    %p100 = scmp.ne.s32.totalorder %s92, %s95
    %p101 = scmp.eq.s32.totalorder %s9, 0
    %p102 = por %p100, %p101
    %p103 = scmp.ne.s32.totalorder %s92, %s95
    %p104 = scmp.eq.s32.totalorder %s14, 1
    %p105 = por %p103, %p104
    %p106 = scmp.ne.s32.totalorder %s95, %s96
    %p107 = scmp.eq.s32.totalorder %s14, 0
    %p108 = por %p106, %p107
    %p109 = scmp.ne.s32.totalorder %s95, %s96
    %p110 = scmp.eq.s32.totalorder %s15, 1
    %p111 = por %p109, %p110
    %p113 = scmp.ne.s32.totalorder %s96, %s112
    %p114 = scmp.eq.s32.totalorder %s15, 0
    %p115 = por %p113, %p114
    %s116 = ssub.s32 %s16, %s35
    %s117 = ssub.s32 %s17, %s31
    %s118 = sor.u32 %s116, %s117
    %p119 = scmp.eq.s32.totalorder %s118, 0
    %s121 = sadd.s32 %s120, 1
    %s122 = scalar_select %p119, %s120, %s121
    %p125 = pneg %p119
    %p126 = scmp.eq.s32.totalorder %s9, 1
    %p127 = por %p125, %p126
    %p128 = scmp.ne.s32.totalorder %s120, %s123
    %p129 = scmp.eq.s32.totalorder %s9, 0
    %p130 = por %p128, %p129
    %p131 = scmp.ne.s32.totalorder %s120, %s123
    %p132 = scmp.eq.s32.totalorder %s14, 1
    %p133 = por %p131, %p132
    %p134 = scmp.ne.s32.totalorder %s123, %s124
    %p135 = scmp.eq.s32.totalorder %s14, 0
    %p136 = por %p134, %p135
    %p137 = scmp.ne.s32.totalorder %s123, %s124
    %p138 = scmp.eq.s32.totalorder %s15, 1
    %p139 = por %p137, %p138
    %p141 = scmp.ne.s32.totalorder %s124, %s140
    %p142 = scmp.eq.s32.totalorder %s15, 0
    %p143 = por %p141, %p142
    %p144 = scmp.le.s32.totalorder 1, %s9
    %p145 = scmp.lt.s32.totalorder %s9, 3
    %p146 = pnand %p144, %p145
    %p147 = pneg %p146
    // Predicated region
    $region9: #{gcn_forward.3} parent=5 // pred_check
      _
    $region10: #{gcn_forward.3} parent=5 // pred_check_branch
      %149 = sbr.rel (%p146) target = $region12
    $region11: #{gcn_forward.3} parent=5 // pred_region
      %s150 = ssub.s32 %s9, 1
      // Predicated region
      $region13: #{gcn_forward.3} parent=11 // pred_check
        %p151 = pneg %p82
      $region14: #{gcn_forward.3} parent=11 // pred_check_branch
        %153 = sbr.rel (%p151) target = $region16
      $region15: #{gcn_forward.3} parent=11 // pred_region
        %s154 = smul.u32 16, %s21
        %p155 = scmp.lt.s32.totalorder %s154, 15
        %s156 = scalar_select %p155, %s154, 15
        %s157 = smul.addr %s156, 4
        %s158 = scalar_lea.vmem %s1, %s157
        %s159 = smul.u32 16, %s21
      $region16: #{gcn_forward.3} parent=11 // pred_fallthru
        _
      // Predicated region
      $region17: #{gcn_forward.3} parent=11 // pred_check
        %p160 = pneg %p108
      $region18: #{gcn_forward.3} parent=11 // pred_check_branch
        %162 = sbr.rel (%p160) target = $region20
      $region19: #{gcn_forward.3} parent=11 // pred_region
        %p163 = scmp.lt.s32.totalorder %s20, 0
        %s164 = scalar_select %p163, %s20, 0
        %s165 = smul.addr %s164, 4
        %s166 = scalar_lea.vmem %s2, %s165
      $region20: #{gcn_forward.3} parent=11 // pred_fallthru
        _
    $region12: #{gcn_forward.3} parent=5 // pred_fallthru
      _
    %p167 = scmp.lt.s32.totalorder %s9, 2
    // Predicated region
    $region21: #{gcn_forward.3} parent=5 // pred_check
      %p168 = pneg %p167
    $region22: #{gcn_forward.3} parent=5 // pred_check_branch
      %170 = sbr.rel (%p168) target = $region24
    $region23: #{gcn_forward.3} parent=5 // pred_region
      // Predicated region
      $region25: #{gcn_forward.3} parent=23 // pred_check
        %p171 = pneg %p50
      $region26: #{gcn_forward.3} parent=23 // pred_check_branch
        %173 = sbr.rel (%p171) target = $region28
      $region27: #{gcn_forward.3} parent=23 // pred_region
        %s174 = smul.u32 8, %s16
        %p175 = scmp.lt.s32.totalorder %s174, 15
        %s176 = scalar_select %p175, %s174, 15
        %p177 = scmp.lt.s32.totalorder %s18, 0
        %s178 = scalar_select %p177, %s18, 0
        %s179 = sadd.s32 %s178, %s176
        %s180 = smul.addr %s179, 4
        %s181 = scalar_lea.vmem %s0, %s180
        %s182 = smul.u32 8, %s16
      $region28: #{gcn_forward.3} parent=23 // pred_fallthru
        _
    $region24: #{gcn_forward.3} parent=5 // pred_fallthru
      _
    %p183 = scmp.le.s32.totalorder 1, %s9
    %p184 = scmp.lt.s32.totalorder %s9, 3
    %p185 = pnand %p183, %p184
    %p186 = pneg %p185
    // Predicated region
    $region29: #{gcn_forward.3} parent=5 // pred_check
      _
    $region30: #{gcn_forward.3} parent=5 // pred_check_branch
      %188 = sbr.rel (%p185) target = $region32
    $region31: #{gcn_forward.3} parent=5 // pred_region
      %s189 = ssub.s32 %s9, 1
      %s190 = smul.u32 8, %s19
      %p191 = scmp.lt.s32.totalorder %s190, 15
      %s192 = scalar_select %p191, %s190, 15
      %p193 = scmp.lt.s32.totalorder %s21, 0
      %s194 = scalar_select %p193, %s21, 0
      %s195 = sadd.s32 %s194, %s192
      %s196 = smul.addr %s195, 4
      %s197 = scalar_lea.vmem %s0, %s196
      %p198 = pneg %p56
      %p199 = pneg %p53
      %s200 = smul.u32 16, %s21
      %p201 = scmp.lt.s32.totalorder %s200, 15
      %s202 = scalar_select %p201, %s200, 15
      %s203 = smul.addr %s202, 4
      %s204 = scalar_lea.vmem %s1, %s203
      %p205 = pneg %p82
      %p206 = pneg %p79
      %p207 = scmp.lt.s32.totalorder %s20, 0
      %s208 = scalar_select %p207, %s20, 0
      %s209 = smul.addr %s208, 4
      %s210 = scalar_lea.vmem %s2, %s209
      %p211 = pneg %p108
      %p212 = pneg %p105
      %p213 = pneg %p136
      %p214 = pneg %p133
      %s215 = smul.u32 8, %s19
      %p216 = scmp.lt.s32.totalorder %s215, 15
      %s217 = scalar_select %p216, %s215, 15
      %p218 = scmp.lt.s32.totalorder %s20, 0
      %s219 = scalar_select %p218, %s20, 0
      %s220 = sadd.s32 %s219, %s217
      %s221 = smul.addr %s220, 4
      %s222 = scalar_lea.vmem %s3, %s221
      %s223 = smul.u32 8, %s19
      %p224 = scmp.lt.s32.totalorder %s223, 15
      %s225 = scalar_select %p224, %s223, 15
      %p226 = scmp.lt.s32.totalorder %s21, 0
      %s227 = scalar_select %p226, %s21, 0
      %s228 = sadd.s32 %s227, %s225
      %s229 = smul.addr %s228, 4
      %s230 = scalar_lea.vmem %s0, %s229
      %s231 = smul.u32 8, %s19
      %s232 = smul.u32 16, %s21
      %p233 = scmp.lt.s32.totalorder %s232, 15
      %s234 = scalar_select %p233, %s232, 15
      %s235 = smul.addr %s234, 4
      %s236 = scalar_lea.vmem %s1, %s235
      %s237 = smul.u32 16, %s21
      %p238 = scmp.lt.s32.totalorder %s20, 0
      %s239 = scalar_select %p238, %s20, 0
      %s240 = smul.addr %s239, 4
      %s241 = scalar_lea.vmem %s2, %s240
      %s242 = smul.u32 8, %s19
      %p243 = scmp.lt.s32.totalorder %s242, 15
      %s244 = scalar_select %p243, %s242, 15
      %p245 = scmp.lt.s32.totalorder %s20, 0
      %s246 = scalar_select %p245, %s20, 0
      %s247 = sadd.s32 %s246, %s244
      %s248 = smul.addr %s247, 4
      %s249 = scalar_lea.vmem %s3, %s248
      %s250 = smul.u32 8, %s19
      %v251 = vld [vmem:[%s236] sm:$0xf]
      %v252 = vld [vmem:[%s236 + $0x4] sm:$0xf]
      %v253 = vld [vmem:[%s236 + $0x8] sm:$0xf]
      %v254 = vld [vmem:[%s236 + $0xc] sm:$0xf]
      %v255 = vld [vmem:[%s236 + $0x10] sm:$0xf]
      %v256 = vld [vmem:[%s236 + $0x14] sm:$0xf]
      %v257 = vld [vmem:[%s236 + $0x18] sm:$0xf]
      %v258 = vld [vmem:[%s236 + $0x1c] sm:$0xf]
      %v259 = vld [vmem:[%s236 + $0x20] sm:$0xf]
      %v260 = vld [vmem:[%s236 + $0x24] sm:$0xf]
      %v261 = vld [vmem:[%s236 + $0x28] sm:$0xf]
      %v262 = vld [vmem:[%s236 + $0x2c] sm:$0xf]
      %v263 = vld [vmem:[%s236 + $0x30] sm:$0xf]
      %v264 = vld [vmem:[%s236 + $0x34] sm:$0xf]
      %v265 = vld [vmem:[%s236 + $0x38] sm:$0xf]
      %v266 = vld [vmem:[%s236 + $0x3c] sm:$0xf]
      %v267 = vld [vmem:[%s241] sm:$0xf]
      %v268 = vld [vmem:[%s241 + $0x4] sm:$0xf]
      %v269 = vld [vmem:[%s241 + $0x8] sm:$0xf]
      %v270 = vld [vmem:[%s241 + $0xc] sm:$0xf]
      %v271 = vld [vmem:[%s241 + $0x10] sm:$0xf]
      %v272 = vld [vmem:[%s241 + $0x14] sm:$0xf]
      %v273 = vld [vmem:[%s241 + $0x18] sm:$0xf]
      %v274 = vld [vmem:[%s241 + $0x1c] sm:$0xf]
      %v275 = vld [vmem:[%s241 + $0x20] sm:$0xf]
      %v276 = vld [vmem:[%s241 + $0x24] sm:$0xf]
      %v277 = vld [vmem:[%s241 + $0x28] sm:$0xf]
      %v278 = vld [vmem:[%s241 + $0x2c] sm:$0xf]
      %v279 = vld [vmem:[%s241 + $0x30] sm:$0xf]
      %v280 = vld [vmem:[%s241 + $0x34] sm:$0xf]
      %v281 = vld [vmem:[%s241 + $0x38] sm:$0xf]
      %v282 = vld [vmem:[%s241 + $0x3c] sm:$0xf]
      %v299 = vunpack.c.l.b16 %v251
      %v300 = vunpack.c.l.b16 %v252
      %v301 = vunpack.c.l.b16 %v253
      %v302 = vunpack.c.l.b16 %v254
      %v303 = vunpack.c.l.b16 %v255
      %v304 = vunpack.c.l.b16 %v256
      %v305 = vunpack.c.l.b16 %v257
      %v306 = vunpack.c.l.b16 %v258
      %v307 = vunpack.c.l.b16 %v259
      %v308 = vunpack.c.l.b16 %v260
      %v309 = vunpack.c.l.b16 %v261
      %v310 = vunpack.c.l.b16 %v262
      %v311 = vunpack.c.l.b16 %v263
      %v312 = vunpack.c.l.b16 %v264
      %v313 = vunpack.c.l.b16 %v265
      %v314 = vunpack.c.l.b16 %v266
      %v315 = vpack.c.b16 %v300, %v299
      %v316 = vpack.c.b16 %v302, %v301
      %v317 = vpack.c.b16 %v304, %v303
      %v318 = vpack.c.b16 %v306, %v305
      %v319 = vpack.c.b16 %v308, %v307
      %v320 = vpack.c.b16 %v310, %v309
      %v321 = vpack.c.b16 %v312, %v311
      %v322 = vpack.c.b16 %v314, %v313
      %v347 = vunpack.c.l.b16 %v267
      %v348 = vunpack.c.l.b16 %v268
      %v349 = vunpack.c.l.b16 %v269
      %v350 = vunpack.c.l.b16 %v270
      %v351 = vunpack.c.l.b16 %v271
      %v352 = vunpack.c.l.b16 %v272
      %v353 = vunpack.c.l.b16 %v273
      %v354 = vunpack.c.l.b16 %v274
      %v355 = vunpack.c.l.b16 %v275
      %v356 = vunpack.c.l.b16 %v276
      %v357 = vunpack.c.l.b16 %v277
      %v358 = vunpack.c.l.b16 %v278
      %v359 = vunpack.c.l.b16 %v279
      %v360 = vunpack.c.l.b16 %v280
      %v361 = vunpack.c.l.b16 %v281
      %v362 = vunpack.c.l.b16 %v282
      %v363 = vpack.c.b16 %v348, %v347
      %v364 = vpack.c.b16 %v350, %v349
      %v365 = vpack.c.b16 %v352, %v351
      %v366 = vpack.c.b16 %v354, %v353
      %v367 = vpack.c.b16 %v356, %v355
      %v368 = vpack.c.b16 %v358, %v357
      %v369 = vpack.c.b16 %v360, %v359
      %v370 = vpack.c.b16 %v362, %v361
      %379 = vmatpush.bf16.msra.mxu0 %v370
      %380 = vmatpush.bf16.msra.mxu0 %v369
      %381 = vmatpush.bf16.msra.mxu0 %v368
      %382 = vmatpush.bf16.msra.mxu0 %v367
      %383 = vmatpush.bf16.msra.mxu0 %v366
      %384 = vmatpush.bf16.msra.mxu0 %v365
      %385 = vmatpush.bf16.msra.mxu0 %v364
      %386 = vmatpush.bf16.msra.mxu0 %v363
      %387 = vmatmul.bf16.gmra.mxu0 %v315
      %v388 = vpop.f32.mrf.mxu0
      %v389 = vadd.f32 0.0, %v388
      %v390 = vpop.f32.mrf.mxu0
      %v391 = vadd.f32 0.0, %v390
      %392 = vmatmul.bf16.gmra.mxu0 %v316
      %v393 = vpop.f32.mrf.mxu0
      %v394 = vadd.f32 0.0, %v393
      %v395 = vpop.f32.mrf.mxu0
      %v396 = vadd.f32 0.0, %v395
      %397 = vmatmul.bf16.gmra.mxu0 %v317
      %v398 = vpop.f32.mrf.mxu0
      %v399 = vadd.f32 0.0, %v398
      %v400 = vpop.f32.mrf.mxu0
      %v401 = vadd.f32 0.0, %v400
      %402 = vmatmul.bf16.gmra.mxu0 %v318
      %v403 = vpop.f32.mrf.mxu0
      %v404 = vadd.f32 0.0, %v403
      %v405 = vpop.f32.mrf.mxu0
      %v406 = vadd.f32 0.0, %v405
      %407 = vmatmul.bf16.gmra.mxu0 %v319
      %v408 = vpop.f32.mrf.mxu0
      %v409 = vadd.f32 0.0, %v408
      %v410 = vpop.f32.mrf.mxu0
      %v411 = vadd.f32 0.0, %v410
      %412 = vmatmul.bf16.gmra.mxu0 %v320
      %v413 = vpop.f32.mrf.mxu0
      %v414 = vadd.f32 0.0, %v413
      %v415 = vpop.f32.mrf.mxu0
      %v416 = vadd.f32 0.0, %v415
      %417 = vmatmul.bf16.gmra.mxu0 %v321
      %v418 = vpop.f32.mrf.mxu0
      %v419 = vadd.f32 0.0, %v418
      %v420 = vpop.f32.mrf.mxu0
      %v421 = vadd.f32 0.0, %v420
      %422 = vmatmul.bf16.gmra.mxu0 %v322
      %v423 = vpop.f32.mrf.mxu0
      %v424 = vadd.f32 0.0, %v423
      %v425 = vpop.f32.mrf.mxu0
      %v426 = vadd.f32 0.0, %v425
      %427 = vdwg.mxu0
      %v428 = vld [vmem:[%s230] sm:$0xf]
      %v429 = vld [vmem:[%s230 + $0x4] sm:$0xf]
      %v430 = vld [vmem:[%s230 + $0x8] sm:$0xf]
      %v431 = vld [vmem:[%s230 + $0xc] sm:$0xf]
      %v432 = vld [vmem:[%s230 + $0x10] sm:$0xf]
      %v433 = vld [vmem:[%s230 + $0x14] sm:$0xf]
      %v434 = vld [vmem:[%s230 + $0x18] sm:$0xf]
      %v435 = vld [vmem:[%s230 + $0x1c] sm:$0xf]
      %v436 = vpack.c.bf16 %v391, %v389
      %v437 = vpack.c.bf16 %v396, %v394
      %v438 = vpack.c.bf16 %v401, %v399
      %v439 = vpack.c.bf16 %v406, %v404
      %v440 = vpack.c.bf16 %v411, %v409
      %v441 = vpack.c.bf16 %v416, %v414
      %v442 = vpack.c.bf16 %v421, %v419
      %v443 = vpack.c.bf16 %v426, %v424
      %v452 = vunpack.c.l.b16 %v428
      %v453 = vunpack.c.l.b16 %v429
      %v454 = vunpack.c.l.b16 %v430
      %v455 = vunpack.c.l.b16 %v431
      %v456 = vunpack.c.l.b16 %v432
      %v457 = vunpack.c.l.b16 %v433
      %v458 = vunpack.c.l.b16 %v434
      %v459 = vunpack.c.l.b16 %v435
      %v460 = vpack.c.b16 %v453, %v452
      %v461 = vpack.c.b16 %v455, %v454
      %v462 = vpack.c.b16 %v457, %v456
      %v463 = vpack.c.b16 %v459, %v458
      %468 = vmatpush.bf16.msra.mxu0 %v443
      %469 = vmatpush.bf16.msra.mxu0 %v442
      %470 = vmatpush.bf16.msra.mxu0 %v441
      %471 = vmatpush.bf16.msra.mxu0 %v440
      %472 = vmatpush.bf16.msra.mxu0 %v439
      %473 = vmatpush.bf16.msra.mxu0 %v438
      %474 = vmatpush.bf16.msra.mxu0 %v437
      %475 = vmatpush.bf16.msra.mxu0 %v436
      %476 = vmatmul.bf16.gmra.mxu0 %v460
      %v477 = vpop.f32.mrf.mxu0
      %v478 = vadd.f32 0.0, %v477
      %v479 = vpop.f32.mrf.mxu0
      %v480 = vadd.f32 0.0, %v479
      %481 = vmatmul.bf16.gmra.mxu0 %v461
      %v482 = vpop.f32.mrf.mxu0
      %v483 = vadd.f32 0.0, %v482
      %v484 = vpop.f32.mrf.mxu0
      %v485 = vadd.f32 0.0, %v484
      %486 = vmatmul.bf16.gmra.mxu0 %v462
      %v487 = vpop.f32.mrf.mxu0
      %v488 = vadd.f32 0.0, %v487
      %v489 = vpop.f32.mrf.mxu0
      %v490 = vadd.f32 0.0, %v489
      %491 = vmatmul.bf16.gmra.mxu0 %v463
      %v492 = vpop.f32.mrf.mxu0
      %v493 = vadd.f32 0.0, %v492
      %v494 = vpop.f32.mrf.mxu0
      %v495 = vadd.f32 0.0, %v494
      %496 = vdwg.mxu0
      %v497 = vmax.f32 %v478, 0.0
      %v498 = vmax.f32 %v480, 0.0
      %v499 = vmax.f32 %v483, 0.0
      %v500 = vmax.f32 %v485, 0.0
      %v501 = vmax.f32 %v488, 0.0
      %v502 = vmax.f32 %v490, 0.0
      %v503 = vmax.f32 %v493, 0.0
      %v504 = vmax.f32 %v495, 0.0
      %v505 = vpack.c.bf16 %v497, %v497
      %v506 = vpack.c.bf16 %v498, %v498
      %v507 = vpack.c.bf16 %v499, %v499
      %v508 = vpack.c.bf16 %v500, %v500
      %v509 = vpack.c.bf16 %v501, %v501
      %v510 = vpack.c.bf16 %v502, %v502
      %v511 = vpack.c.bf16 %v503, %v503
      %v512 = vpack.c.bf16 %v504, %v504
      %513 = vst [vmem:[%s249] sm:$0xf] %v505
      %514 = vst [vmem:[%s249 + $0x4] sm:$0xf] %v506
      %515 = vst [vmem:[%s249 + $0x8] sm:$0xf] %v507
      %516 = vst [vmem:[%s249 + $0xc] sm:$0xf] %v508
      %517 = vst [vmem:[%s249 + $0x10] sm:$0xf] %v509
      %518 = vst [vmem:[%s249 + $0x14] sm:$0xf] %v510
      %519 = vst [vmem:[%s249 + $0x18] sm:$0xf] %v511
      %520 = vst [vmem:[%s249 + $0x1c] sm:$0xf] %v512
      %s521 = smul.u32 8, %s19
      %p522 = scmp.lt.s32.totalorder %s521, 15
      %s523 = scalar_select %p522, %s521, 15
      %p524 = scmp.lt.s32.totalorder %s20, 0
      %s525 = scalar_select %p524, %s20, 0
      %s526 = sadd.s32 %s525, %s523
      %s527 = smul.addr %s526, 4
      %s528 = scalar_lea.vmem %s3, %s527
      // Predicated region
      $region33: #{gcn_forward.3} parent=31 // pred_check
        %p529 = pneg %p133
      $region34: #{gcn_forward.3} parent=31 // pred_check_branch
        %531 = sbr.rel (%p529) target = $region36
      $region35: #{gcn_forward.3} parent=31 // pred_region
        %s532 = smul.u32 8, %s19
      $region36: #{gcn_forward.3} parent=31 // pred_fallthru
        _
    $region32: #{gcn_forward.3} parent=5 // pred_fallthru
      _
    %p533 = scmp.le.s32.totalorder 2, %s9
    // Predicated region
    $region37: #{gcn_forward.3} parent=5 // pred_check
      %p534 = pneg %p533
    $region38: #{gcn_forward.3} parent=5 // pred_check_branch
      %536 = sbr.rel (%p534) target = $region40
    $region39: #{gcn_forward.3} parent=5 // pred_region
      %s537 = ssub.s32 %s9, 2
      // Predicated region
      $region41: #{gcn_forward.3} parent=39 // pred_check
        %p538 = pneg %p139
      $region42: #{gcn_forward.3} parent=39 // pred_check_branch
        %540 = sbr.rel (%p538) target = $region44
      $region43: #{gcn_forward.3} parent=39 // pred_region
        %s541 = smul.u32 8, %s22
        %p542 = scmp.lt.s32.totalorder %s541, 15
        %s543 = scalar_select %p542, %s541, 15
        %p544 = scmp.lt.s32.totalorder %s23, 0
        %s545 = scalar_select %p544, %s23, 0
        %s546 = sadd.s32 %s545, %s543
        %s547 = smul.addr %s546, 4
        %s548 = scalar_lea.vmem %s3, %s547
      $region44: #{gcn_forward.3} parent=39 // pred_fallthru
        _
    $region40: #{gcn_forward.3} parent=5 // pred_fallthru
      _
  $region6: #{gcn_forward.3} parent=0 // loop_footer
    %s13 = sadd.s32 1, %s9
  $region7: #{gcn_forward.3} parent=0 // loop_footer_branch
    %8 = sbr.rel target = $region3
  $region8: #{gcn_forward.3} parent=0 // loop_exit
    _

// kernel: gcn_forward.5
$region0: #{gcn_forward.5}
  #allocation0 [shape = 'u32[]', space=smem, size = 0x4, offset = 0x4, fixed_abs, tag = 'smem constant byte address 0x4 - core index']
  #allocation1 [shape = 'u32[72,128]{1,0:T(1,128)}', space=vmem, size = 0x9000, scoped, tag = 'internal scratch']
  %s0 = inlined_call_operand.vmem [shape: bf16[128,128], index: 0, kind: input, shape index: {}]
  %s1 = inlined_call_operand.vmem [shape: bf16[128,128], index: 1, kind: input, shape index: {}]
  %s2 = inlined_call_operand.vmem [shape: bf16[128,128], index: 2, kind: input, shape index: {}]
  %s3 = inlined_call_operand.vmem [shape: bf16[128,128], index: 3, kind: output, shape index: {}]
  %s4 = sld [smem:[#allocation0]]
  $region45: #{gcn_forward.5} parent=0
    _
  %s6 = ssub.s32 1, %s4
  %s7 = scalar_select 0, %s6, %s4
  loop: start=0, step=1, limit=4
  $region2: #{gcn_forward.5} parent=0 // loop_pre_header
    _
  $region3: #{gcn_forward.5} parent=0 // loop_header
    %s9 = sphi 0, %s13
    %p10 = scmp.ge.s32.totalorder %s9, 4
    %s16 = sphi 0, %s35
    %s17 = sphi 0, %s31
    %s18 = sphi 0, %s27
    %s19 = sphi 0, %s16
    %s20 = sphi 0, %s17
    %s21 = sphi 0, %s18
    %s22 = sphi 0, %s19
    %s23 = sphi 0, %s20
    %s24 = sphi 0, %s21
    %s40 = sphi 0, %s42
    %s43 = sphi 0, %s40
    %s44 = sphi 0, %s43
    %s60 = sphi 0, %s44
    %s66 = sphi 0, %s68
    %s69 = sphi 0, %s66
    %s70 = sphi 0, %s69
    %s86 = sphi 0, %s70
    %s92 = sphi 0, %s94
    %s95 = sphi 0, %s92
    %s96 = sphi 0, %s95
    %s112 = sphi 0, %s96
    %s120 = sphi 0, %s122
    %s123 = sphi 0, %s120
    %s124 = sphi 0, %s123
    %s140 = sphi 0, %s124
  $region4: #{gcn_forward.5} parent=0 // loop_header_branch
    %12 = sbr.rel (%p10) target = $region8
  $region5: #{gcn_forward.5} parent=0 // loop_body
    %s14 = ssub.s32 %s9, 1
    %s15 = ssub.s32 %s9, 2
    %s25 = sadd.s32 1, %s18
    %p26 = scmp.ge.s32.totalorder %s25, 1
    %s27 = scalar_select %p26, 0, %s25
    %s28 = sadd.s32 1, %s17
    %s29 = scalar_select %p26, %s28, %s17
    %p30 = scmp.ge.s32.totalorder %s29, 1
    %s31 = scalar_select %p30, 0, %s29
    %s32 = sadd.s32 1, %s16
    %s33 = scalar_select %p30, %s32, %s16
    %p34 = scmp.ge.s32.totalorder %s33, 2
    %s35 = scalar_select %p34, 0, %s33
    %s36 = ssub.s32 %s16, %s35
    %s37 = ssub.s32 %s18, %s27
    %s38 = sor.u32 %s36, %s37
    %p39 = scmp.eq.s32.totalorder %s38, 0
    %s41 = sadd.s32 %s40, 1
    %s42 = scalar_select %p39, %s40, %s41
    %p45 = pneg %p39
    %p46 = scmp.eq.s32.totalorder %s9, 1
    %p47 = por %p45, %p46
    %p48 = scmp.ne.s32.totalorder %s40, %s43
    %p49 = scmp.eq.s32.totalorder %s9, 0
    %p50 = por %p48, %p49
    %p51 = scmp.ne.s32.totalorder %s40, %s43
    %p52 = scmp.eq.s32.totalorder %s14, 1
    %p53 = por %p51, %p52
    %p54 = scmp.ne.s32.totalorder %s43, %s44
    %p55 = scmp.eq.s32.totalorder %s14, 0
    %p56 = por %p54, %p55
    %p57 = scmp.ne.s32.totalorder %s43, %s44
    %p58 = scmp.eq.s32.totalorder %s15, 1
    %p59 = por %p57, %p58
    %p61 = scmp.ne.s32.totalorder %s44, %s60
    %p62 = scmp.eq.s32.totalorder %s15, 0
    %p63 = por %p61, %p62
    %s64 = ssub.s32 %s18, %s27
    %p65 = scmp.eq.s32.totalorder %s64, 0
    %s67 = sadd.s32 %s66, 1
    %s68 = scalar_select %p65, %s66, %s67
    %p71 = pneg %p65
    %p72 = scmp.eq.s32.totalorder %s9, 1
    %p73 = por %p71, %p72
    %p74 = scmp.ne.s32.totalorder %s66, %s69
    %p75 = scmp.eq.s32.totalorder %s9, 0
    %p76 = por %p74, %p75
    %p77 = scmp.ne.s32.totalorder %s66, %s69
    %p78 = scmp.eq.s32.totalorder %s14, 1
    %p79 = por %p77, %p78
    %p80 = scmp.ne.s32.totalorder %s69, %s70
    %p81 = scmp.eq.s32.totalorder %s14, 0
    %p82 = por %p80, %p81
    %p83 = scmp.ne.s32.totalorder %s69, %s70
    %p84 = scmp.eq.s32.totalorder %s15, 1
    %p85 = por %p83, %p84
    %p87 = scmp.ne.s32.totalorder %s70, %s86
    %p88 = scmp.eq.s32.totalorder %s15, 0
    %p89 = por %p87, %p88
    %s90 = ssub.s32 %s17, %s31
    %p91 = scmp.eq.s32.totalorder %s90, 0
    %s93 = sadd.s32 %s92, 1
    %s94 = scalar_select %p91, %s92, %s93
    %p97 = pneg %p91
    %p98 = scmp.eq.s32.totalorder %s9, 1
    %p99 = por %p97, %p98
    %p100 = scmp.ne.s32.totalorder %s92, %s95
    %p101 = scmp.eq.s32.totalorder %s9, 0
    %p102 = por %p100, %p101
    %p103 = scmp.ne.s32.totalorder %s92, %s95
    %p104 = scmp.eq.s32.totalorder %s14, 1
    %p105 = por %p103, %p104
    %p106 = scmp.ne.s32.totalorder %s95, %s96
    %p107 = scmp.eq.s32.totalorder %s14, 0
    %p108 = por %p106, %p107
    %p109 = scmp.ne.s32.totalorder %s95, %s96
    %p110 = scmp.eq.s32.totalorder %s15, 1
    %p111 = por %p109, %p110
    %p113 = scmp.ne.s32.totalorder %s96, %s112
    %p114 = scmp.eq.s32.totalorder %s15, 0
    %p115 = por %p113, %p114
    %s116 = ssub.s32 %s16, %s35
    %s117 = ssub.s32 %s17, %s31
    %s118 = sor.u32 %s116, %s117
    %p119 = scmp.eq.s32.totalorder %s118, 0
    %s121 = sadd.s32 %s120, 1
    %s122 = scalar_select %p119, %s120, %s121
    %p125 = pneg %p119
    %p126 = scmp.eq.s32.totalorder %s9, 1
    %p127 = por %p125, %p126
    %p128 = scmp.ne.s32.totalorder %s120, %s123
    %p129 = scmp.eq.s32.totalorder %s9, 0
    %p130 = por %p128, %p129
    %p131 = scmp.ne.s32.totalorder %s120, %s123
    %p132 = scmp.eq.s32.totalorder %s14, 1
    %p133 = por %p131, %p132
    %p134 = scmp.ne.s32.totalorder %s123, %s124
    %p135 = scmp.eq.s32.totalorder %s14, 0
    %p136 = por %p134, %p135
    %p137 = scmp.ne.s32.totalorder %s123, %s124
    %p138 = scmp.eq.s32.totalorder %s15, 1
    %p139 = por %p137, %p138
    %p141 = scmp.ne.s32.totalorder %s124, %s140
    %p142 = scmp.eq.s32.totalorder %s15, 0
    %p143 = por %p141, %p142
    %p144 = scmp.le.s32.totalorder 1, %s9
    %p145 = scmp.lt.s32.totalorder %s9, 3
    %p146 = pnand %p144, %p145
    %p147 = pneg %p146
    // Predicated region
    $region9: #{gcn_forward.5} parent=5 // pred_check
      _
    $region10: #{gcn_forward.5} parent=5 // pred_check_branch
      %149 = sbr.rel (%p146) target = $region12
    $region11: #{gcn_forward.5} parent=5 // pred_region
      %s150 = ssub.s32 %s9, 1
      // Predicated region
      $region13: #{gcn_forward.5} parent=11 // pred_check
        %p151 = pneg %p82
      $region14: #{gcn_forward.5} parent=11 // pred_check_branch
        %153 = sbr.rel (%p151) target = $region16
      $region15: #{gcn_forward.5} parent=11 // pred_region
        %s154 = smul.u32 16, %s21
        %p155 = scmp.lt.s32.totalorder %s154, 15
        %s156 = scalar_select %p155, %s154, 15
        %s157 = smul.addr %s156, 4
        %s158 = scalar_lea.vmem %s1, %s157
        %s159 = smul.u32 16, %s21
      $region16: #{gcn_forward.5} parent=11 // pred_fallthru
        _
      // Predicated region
      $region17: #{gcn_forward.5} parent=11 // pred_check
        %p160 = pneg %p108
      $region18: #{gcn_forward.5} parent=11 // pred_check_branch
        %162 = sbr.rel (%p160) target = $region20
      $region19: #{gcn_forward.5} parent=11 // pred_region
        %p163 = scmp.lt.s32.totalorder %s20, 0
        %s164 = scalar_select %p163, %s20, 0
        %s165 = smul.addr %s164, 4
        %s166 = scalar_lea.vmem %s2, %s165
      $region20: #{gcn_forward.5} parent=11 // pred_fallthru
        _
    $region12: #{gcn_forward.5} parent=5 // pred_fallthru
      _
    %p167 = scmp.lt.s32.totalorder %s9, 2
    // Predicated region
    $region21: #{gcn_forward.5} parent=5 // pred_check
      %p168 = pneg %p167
    $region22: #{gcn_forward.5} parent=5 // pred_check_branch
      %170 = sbr.rel (%p168) target = $region24
    $region23: #{gcn_forward.5} parent=5 // pred_region
      // Predicated region
      $region25: #{gcn_forward.5} parent=23 // pred_check
        %p171 = pneg %p50
      $region26: #{gcn_forward.5} parent=23 // pred_check_branch
        %173 = sbr.rel (%p171) target = $region28
      $region27: #{gcn_forward.5} parent=23 // pred_region
        %s174 = smul.u32 8, %s16
        %p175 = scmp.lt.s32.totalorder %s174, 15
        %s176 = scalar_select %p175, %s174, 15
        %p177 = scmp.lt.s32.totalorder %s18, 0
        %s178 = scalar_select %p177, %s18, 0
        %s179 = sadd.s32 %s178, %s176
        %s180 = smul.addr %s179, 4
        %s181 = scalar_lea.vmem %s0, %s180
        %s182 = smul.u32 8, %s16
      $region28: #{gcn_forward.5} parent=23 // pred_fallthru
        _
    $region24: #{gcn_forward.5} parent=5 // pred_fallthru
      _
    %p183 = scmp.le.s32.totalorder 1, %s9
    %p184 = scmp.lt.s32.totalorder %s9, 3
    %p185 = pnand %p183, %p184
    %p186 = pneg %p185
    // Predicated region
    $region29: #{gcn_forward.5} parent=5 // pred_check
      _
    $region30: #{gcn_forward.5} parent=5 // pred_check_branch
      %188 = sbr.rel (%p185) target = $region32
    $region31: #{gcn_forward.5} parent=5 // pred_region
      %s189 = ssub.s32 %s9, 1
      %s190 = smul.u32 8, %s19
      %p191 = scmp.lt.s32.totalorder %s190, 15
      %s192 = scalar_select %p191, %s190, 15
      %p193 = scmp.lt.s32.totalorder %s21, 0
      %s194 = scalar_select %p193, %s21, 0
      %s195 = sadd.s32 %s194, %s192
      %s196 = smul.addr %s195, 4
      %s197 = scalar_lea.vmem %s0, %s196
      %p198 = pneg %p56
      %p199 = pneg %p53
      %s200 = smul.u32 16, %s21
      %p201 = scmp.lt.s32.totalorder %s200, 15
      %s202 = scalar_select %p201, %s200, 15
      %s203 = smul.addr %s202, 4
      %s204 = scalar_lea.vmem %s1, %s203
      %p205 = pneg %p82
      %p206 = pneg %p79
      %p207 = scmp.lt.s32.totalorder %s20, 0
      %s208 = scalar_select %p207, %s20, 0
      %s209 = smul.addr %s208, 4
      %s210 = scalar_lea.vmem %s2, %s209
      %p211 = pneg %p108
      %p212 = pneg %p105
      %p213 = pneg %p136
      %p214 = pneg %p133
      %s215 = smul.u32 8, %s19
      %p216 = scmp.lt.s32.totalorder %s215, 15
      %s217 = scalar_select %p216, %s215, 15
      %p218 = scmp.lt.s32.totalorder %s20, 0
      %s219 = scalar_select %p218, %s20, 0
      %s220 = sadd.s32 %s219, %s217
      %s221 = smul.addr %s220, 4
      %s222 = scalar_lea.vmem %s3, %s221
      %s223 = smul.u32 8, %s19
      %p224 = scmp.lt.s32.totalorder %s223, 15
      %s225 = scalar_select %p224, %s223, 15
      %p226 = scmp.lt.s32.totalorder %s21, 0
      %s227 = scalar_select %p226, %s21, 0
      %s228 = sadd.s32 %s227, %s225
      %s229 = smul.addr %s228, 4
      %s230 = scalar_lea.vmem %s0, %s229
      %s231 = smul.u32 8, %s19
      %s232 = smul.u32 16, %s21
      %p233 = scmp.lt.s32.totalorder %s232, 15
      %s234 = scalar_select %p233, %s232, 15
      %s235 = smul.addr %s234, 4
      %s236 = scalar_lea.vmem %s1, %s235
      %s237 = smul.u32 16, %s21
      %p238 = scmp.lt.s32.totalorder %s20, 0
      %s239 = scalar_select %p238, %s20, 0
      %s240 = smul.addr %s239, 4
      %s241 = scalar_lea.vmem %s2, %s240
      %s242 = smul.u32 8, %s19
      %p243 = scmp.lt.s32.totalorder %s242, 15
      %s244 = scalar_select %p243, %s242, 15
      %p245 = scmp.lt.s32.totalorder %s20, 0
      %s246 = scalar_select %p245, %s20, 0
      %s247 = sadd.s32 %s246, %s244
      %s248 = smul.addr %s247, 4
      %s249 = scalar_lea.vmem %s3, %s248
      %s250 = smul.u32 8, %s19
      %v251 = vld [vmem:[%s236] sm:$0xf]
      %v252 = vld [vmem:[%s236 + $0x4] sm:$0xf]
      %v253 = vld [vmem:[%s236 + $0x8] sm:$0xf]
      %v254 = vld [vmem:[%s236 + $0xc] sm:$0xf]
      %v255 = vld [vmem:[%s236 + $0x10] sm:$0xf]
      %v256 = vld [vmem:[%s236 + $0x14] sm:$0xf]
      %v257 = vld [vmem:[%s236 + $0x18] sm:$0xf]
      %v258 = vld [vmem:[%s236 + $0x1c] sm:$0xf]
      %v259 = vld [vmem:[%s236 + $0x20] sm:$0xf]
      %v260 = vld [vmem:[%s236 + $0x24] sm:$0xf]
      %v261 = vld [vmem:[%s236 + $0x28] sm:$0xf]
      %v262 = vld [vmem:[%s236 + $0x2c] sm:$0xf]
      %v263 = vld [vmem:[%s236 + $0x30] sm:$0xf]
      %v264 = vld [vmem:[%s236 + $0x34] sm:$0xf]
      %v265 = vld [vmem:[%s236 + $0x38] sm:$0xf]
      %v266 = vld [vmem:[%s236 + $0x3c] sm:$0xf]
      %v267 = vld [vmem:[%s241] sm:$0xf]
      %v268 = vld [vmem:[%s241 + $0x4] sm:$0xf]
      %v269 = vld [vmem:[%s241 + $0x8] sm:$0xf]
      %v270 = vld [vmem:[%s241 + $0xc] sm:$0xf]
      %v271 = vld [vmem:[%s241 + $0x10] sm:$0xf]
      %v272 = vld [vmem:[%s241 + $0x14] sm:$0xf]
      %v273 = vld [vmem:[%s241 + $0x18] sm:$0xf]
      %v274 = vld [vmem:[%s241 + $0x1c] sm:$0xf]
      %v275 = vld [vmem:[%s241 + $0x20] sm:$0xf]
      %v276 = vld [vmem:[%s241 + $0x24] sm:$0xf]
      %v277 = vld [vmem:[%s241 + $0x28] sm:$0xf]
      %v278 = vld [vmem:[%s241 + $0x2c] sm:$0xf]
      %v279 = vld [vmem:[%s241 + $0x30] sm:$0xf]
      %v280 = vld [vmem:[%s241 + $0x34] sm:$0xf]
      %v281 = vld [vmem:[%s241 + $0x38] sm:$0xf]
      %v282 = vld [vmem:[%s241 + $0x3c] sm:$0xf]
      %v299 = vunpack.c.l.b16 %v251
      %v300 = vunpack.c.l.b16 %v252
      %v301 = vunpack.c.l.b16 %v253
      %v302 = vunpack.c.l.b16 %v254
      %v303 = vunpack.c.l.b16 %v255
      %v304 = vunpack.c.l.b16 %v256
      %v305 = vunpack.c.l.b16 %v257
      %v306 = vunpack.c.l.b16 %v258
      %v307 = vunpack.c.l.b16 %v259
      %v308 = vunpack.c.l.b16 %v260
      %v309 = vunpack.c.l.b16 %v261
      %v310 = vunpack.c.l.b16 %v262
      %v311 = vunpack.c.l.b16 %v263
      %v312 = vunpack.c.l.b16 %v264
      %v313 = vunpack.c.l.b16 %v265
      %v314 = vunpack.c.l.b16 %v266
      %v315 = vpack.c.b16 %v300, %v299
      %v316 = vpack.c.b16 %v302, %v301
      %v317 = vpack.c.b16 %v304, %v303
      %v318 = vpack.c.b16 %v306, %v305
      %v319 = vpack.c.b16 %v308, %v307
      %v320 = vpack.c.b16 %v310, %v309
      %v321 = vpack.c.b16 %v312, %v311
      %v322 = vpack.c.b16 %v314, %v313
      %v347 = vunpack.c.l.b16 %v267
      %v348 = vunpack.c.l.b16 %v268
      %v349 = vunpack.c.l.b16 %v269
      %v350 = vunpack.c.l.b16 %v270
      %v351 = vunpack.c.l.b16 %v271
      %v352 = vunpack.c.l.b16 %v272
      %v353 = vunpack.c.l.b16 %v273
      %v354 = vunpack.c.l.b16 %v274
      %v355 = vunpack.c.l.b16 %v275
      %v356 = vunpack.c.l.b16 %v276
      %v357 = vunpack.c.l.b16 %v277
      %v358 = vunpack.c.l.b16 %v278
      %v359 = vunpack.c.l.b16 %v279
      %v360 = vunpack.c.l.b16 %v280
      %v361 = vunpack.c.l.b16 %v281
      %v362 = vunpack.c.l.b16 %v282
      %v363 = vpack.c.b16 %v348, %v347
      %v364 = vpack.c.b16 %v350, %v349
      %v365 = vpack.c.b16 %v352, %v351
      %v366 = vpack.c.b16 %v354, %v353
      %v367 = vpack.c.b16 %v356, %v355
      %v368 = vpack.c.b16 %v358, %v357
      %v369 = vpack.c.b16 %v360, %v359
      %v370 = vpack.c.b16 %v362, %v361
      %379 = vmatpush.bf16.msra.mxu0 %v370
      %380 = vmatpush.bf16.msra.mxu0 %v369
      %381 = vmatpush.bf16.msra.mxu0 %v368
      %382 = vmatpush.bf16.msra.mxu0 %v367
      %383 = vmatpush.bf16.msra.mxu0 %v366
      %384 = vmatpush.bf16.msra.mxu0 %v365
      %385 = vmatpush.bf16.msra.mxu0 %v364
      %386 = vmatpush.bf16.msra.mxu0 %v363
      %387 = vmatmul.bf16.gmra.mxu0 %v315
      %v388 = vpop.f32.mrf.mxu0
      %v389 = vadd.f32 0.0, %v388
      %v390 = vpop.f32.mrf.mxu0
      %v391 = vadd.f32 0.0, %v390
      %392 = vmatmul.bf16.gmra.mxu0 %v316
      %v393 = vpop.f32.mrf.mxu0
      %v394 = vadd.f32 0.0, %v393
      %v395 = vpop.f32.mrf.mxu0
      %v396 = vadd.f32 0.0, %v395
      %397 = vmatmul.bf16.gmra.mxu0 %v317
      %v398 = vpop.f32.mrf.mxu0
      %v399 = vadd.f32 0.0, %v398
      %v400 = vpop.f32.mrf.mxu0
      %v401 = vadd.f32 0.0, %v400
      %402 = vmatmul.bf16.gmra.mxu0 %v318
      %v403 = vpop.f32.mrf.mxu0
      %v404 = vadd.f32 0.0, %v403
      %v405 = vpop.f32.mrf.mxu0
      %v406 = vadd.f32 0.0, %v405
      %407 = vmatmul.bf16.gmra.mxu0 %v319
      %v408 = vpop.f32.mrf.mxu0
      %v409 = vadd.f32 0.0, %v408
      %v410 = vpop.f32.mrf.mxu0
      %v411 = vadd.f32 0.0, %v410
      %412 = vmatmul.bf16.gmra.mxu0 %v320
      %v413 = vpop.f32.mrf.mxu0
      %v414 = vadd.f32 0.0, %v413
      %v415 = vpop.f32.mrf.mxu0
      %v416 = vadd.f32 0.0, %v415
      %417 = vmatmul.bf16.gmra.mxu0 %v321
      %v418 = vpop.f32.mrf.mxu0
      %v419 = vadd.f32 0.0, %v418
      %v420 = vpop.f32.mrf.mxu0
      %v421 = vadd.f32 0.0, %v420
      %422 = vmatmul.bf16.gmra.mxu0 %v322
      %v423 = vpop.f32.mrf.mxu0
      %v424 = vadd.f32 0.0, %v423
      %v425 = vpop.f32.mrf.mxu0
      %v426 = vadd.f32 0.0, %v425
      %427 = vdwg.mxu0
      %v428 = vld [vmem:[%s230] sm:$0xf]
      %v429 = vld [vmem:[%s230 + $0x4] sm:$0xf]
      %v430 = vld [vmem:[%s230 + $0x8] sm:$0xf]
      %v431 = vld [vmem:[%s230 + $0xc] sm:$0xf]
      %v432 = vld [vmem:[%s230 + $0x10] sm:$0xf]
      %v433 = vld [vmem:[%s230 + $0x14] sm:$0xf]
      %v434 = vld [vmem:[%s230 + $0x18] sm:$0xf]
      %v435 = vld [vmem:[%s230 + $0x1c] sm:$0xf]
      %v436 = vpack.c.bf16 %v391, %v389
      %v437 = vpack.c.bf16 %v396, %v394
      %v438 = vpack.c.bf16 %v401, %v399
      %v439 = vpack.c.bf16 %v406, %v404
      %v440 = vpack.c.bf16 %v411, %v409
      %v441 = vpack.c.bf16 %v416, %v414
      %v442 = vpack.c.bf16 %v421, %v419
      %v443 = vpack.c.bf16 %v426, %v424
      %v452 = vunpack.c.l.b16 %v428
      %v453 = vunpack.c.l.b16 %v429
      %v454 = vunpack.c.l.b16 %v430
      %v455 = vunpack.c.l.b16 %v431
      %v456 = vunpack.c.l.b16 %v432
      %v457 = vunpack.c.l.b16 %v433
      %v458 = vunpack.c.l.b16 %v434
      %v459 = vunpack.c.l.b16 %v435
      %v460 = vpack.c.b16 %v453, %v452
      %v461 = vpack.c.b16 %v455, %v454
      %v462 = vpack.c.b16 %v457, %v456
      %v463 = vpack.c.b16 %v459, %v458
      %468 = vmatpush.bf16.msra.mxu0 %v443
      %469 = vmatpush.bf16.msra.mxu0 %v442
      %470 = vmatpush.bf16.msra.mxu0 %v441
      %471 = vmatpush.bf16.msra.mxu0 %v440
      %472 = vmatpush.bf16.msra.mxu0 %v439
      %473 = vmatpush.bf16.msra.mxu0 %v438
      %474 = vmatpush.bf16.msra.mxu0 %v437
      %475 = vmatpush.bf16.msra.mxu0 %v436
      %476 = vmatmul.bf16.gmra.mxu0 %v460
      %v477 = vpop.f32.mrf.mxu0
      %v478 = vadd.f32 0.0, %v477
      %v479 = vpop.f32.mrf.mxu0
      %v480 = vadd.f32 0.0, %v479
      %481 = vmatmul.bf16.gmra.mxu0 %v461
      %v482 = vpop.f32.mrf.mxu0
      %v483 = vadd.f32 0.0, %v482
      %v484 = vpop.f32.mrf.mxu0
      %v485 = vadd.f32 0.0, %v484
      %486 = vmatmul.bf16.gmra.mxu0 %v462
      %v487 = vpop.f32.mrf.mxu0
      %v488 = vadd.f32 0.0, %v487
      %v489 = vpop.f32.mrf.mxu0
      %v490 = vadd.f32 0.0, %v489
      %491 = vmatmul.bf16.gmra.mxu0 %v463
      %v492 = vpop.f32.mrf.mxu0
      %v493 = vadd.f32 0.0, %v492
      %v494 = vpop.f32.mrf.mxu0
      %v495 = vadd.f32 0.0, %v494
      %496 = vdwg.mxu0
      %v497 = vpack.c.bf16 %v478, %v478
      %v498 = vpack.c.bf16 %v480, %v480
      %v499 = vpack.c.bf16 %v483, %v483
      %v500 = vpack.c.bf16 %v485, %v485
      %v501 = vpack.c.bf16 %v488, %v488
      %v502 = vpack.c.bf16 %v490, %v490
      %v503 = vpack.c.bf16 %v493, %v493
      %v504 = vpack.c.bf16 %v495, %v495
      %505 = vst [vmem:[%s249] sm:$0xf] %v497
      %506 = vst [vmem:[%s249 + $0x4] sm:$0xf] %v498
      %507 = vst [vmem:[%s249 + $0x8] sm:$0xf] %v499
      %508 = vst [vmem:[%s249 + $0xc] sm:$0xf] %v500
      %509 = vst [vmem:[%s249 + $0x10] sm:$0xf] %v501
      %510 = vst [vmem:[%s249 + $0x14] sm:$0xf] %v502
      %511 = vst [vmem:[%s249 + $0x18] sm:$0xf] %v503
      %512 = vst [vmem:[%s249 + $0x1c] sm:$0xf] %v504
      %s513 = smul.u32 8, %s19
      %p514 = scmp.lt.s32.totalorder %s513, 15
      %s515 = scalar_select %p514, %s513, 15
      %p516 = scmp.lt.s32.totalorder %s20, 0
      %s517 = scalar_select %p516, %s20, 0
      %s518 = sadd.s32 %s517, %s515
      %s519 = smul.addr %s518, 4
      %s520 = scalar_lea.vmem %s3, %s519
      // Predicated region
      $region33: #{gcn_forward.5} parent=31 // pred_check
        %p521 = pneg %p133
      $region34: #{gcn_forward.5} parent=31 // pred_check_branch
        %523 = sbr.rel (%p521) target = $region36
      $region35: #{gcn_forward.5} parent=31 // pred_region
        %s524 = smul.u32 8, %s19
      $region36: #{gcn_forward.5} parent=31 // pred_fallthru
        _
    $region32: #{gcn_forward.5} parent=5 // pred_fallthru
      _
    %p525 = scmp.le.s32.totalorder 2, %s9
    // Predicated region
    $region37: #{gcn_forward.5} parent=5 // pred_check
      %p526 = pneg %p525
    $region38: #{gcn_forward.5} parent=5 // pred_check_branch
      %528 = sbr.rel (%p526) target = $region40
    $region39: #{gcn_forward.5} parent=5 // pred_region
      %s529 = ssub.s32 %s9, 2
      // Predicated region
      $region41: #{gcn_forward.5} parent=39 // pred_check
        %p530 = pneg %p139
      $region42: #{gcn_forward.5} parent=39 // pred_check_branch
        %532 = sbr.rel (%p530) target = $region44
      $region43: #{gcn_forward.5} parent=39 // pred_region
        %s533 = smul.u32 8, %s22
        %p534 = scmp.lt.s32.totalorder %s533, 15
        %s535 = scalar_select %p534, %s533, 15
        %p536 = scmp.lt.s32.totalorder %s23, 0
        %s537 = scalar_select %p536, %s23, 0
        %s538 = sadd.s32 %s537, %s535
        %s539 = smul.addr %s538, 4
        %s540 = scalar_lea.vmem %s3, %s539
      $region44: #{gcn_forward.5} parent=39 // pred_fallthru
        _
    $region40: #{gcn_forward.5} parent=5 // pred_fallthru
      _
  $region6: #{gcn_forward.5} parent=0 // loop_footer
    %s13 = sadd.s32 1, %s9
  $region7: #{gcn_forward.5} parent=0 // loop_footer_branch
    %8 = sbr.rel target = $region3
  $region8: #{gcn_forward.5} parent=0 // loop_exit
    _

</llo_original>
